<compile_context>
chip_gen: v6e
topology: v6e:2x2x1
jax: 0.10.0
libtpu: 0.0.40
codegen_flags: <defaults>
</compile_context>

<pallas_src>
import jax
import jax.numpy as jnp
from jax.experimental import pallas as pl
from jax.experimental.pallas import tpu as pltpu

MAX_LENGTH = 50


def attn_decoder_kernel(
    ids_ref, hid_ref, enc_ref,
    tok_tab_ref, hid_pack_ref, w_ctx_ref, w_ih_ref, w_out_ref,
    b_gates_ref, b_out_ref,
    logp_ref, hid_out_ref, attnw_ref,
):
    B, H = hid_ref.shape
    L = attnw_ref.shape[1]
    O = tok_tab_ref.shape[0]

    hid = hid_ref[...]                                   # (B, H) previous GRU hidden

    # In-kernel embedding lookup via one-hot matmul; the table is pre-folded
    # through the attention / combine weights (+ their biases) in prepare_weights.
    # TODO(synk): dropout(p=0.1) implemented as identity (eval mode); train-mode RNG dropout omitted.
    onehot = (jax.lax.broadcasted_iota(jnp.int32, (B, O), 1)
              == ids_ref[...]).astype(jnp.float32)       # (B, O)
    tok = jnp.dot(onehot, tok_tab_ref[...],
                  preferred_element_type=jnp.float32)    # (B, L+H)

    # All matmuls with LHS == hid fused into one push: [W_attn_hid | W_hh].
    hidc = jnp.dot(hid, hid_pack_ref[...],
                   preferred_element_type=jnp.float32)   # (B, L+3H)

    # attention softmax (biases already folded into tok_tab)
    attn_logits = tok[:, :L] + hidc[:, :L]               # (B, L)
    m = jnp.max(attn_logits, axis=1, keepdims=True)
    e = jnp.exp(attn_logits - m)
    s = jnp.sum(e, axis=1, keepdims=True)
    inv = pl.reciprocal(s, approx=True)                  # EUP vrcp (free slot)
    inv = inv * (2.0 - s * inv)                          # one Newton step -> f32 accuracy
    attn_w = e * inv                                     # (B, L)
    attnw_ref[...] = attn_w

    # weighted context; encoder bias collapsed into b_comb' (softmax rows sum to 1)
    ctx = jax.lax.dot_general(
        attn_w[:, None, :], enc_ref[...],
        dimension_numbers=(((2,), (1,)), ((0,), (0,))),
        preferred_element_type=jnp.float32)[:, 0, :]     # (B, 2H)

    # combine + folded encoder projection + ReLU  (ctx -> x is now one matmul)
    x = jnp.maximum(
        tok[:, L:] + jnp.dot(ctx, w_ctx_ref[...],
                             preferred_element_type=jnp.float32), 0.0)   # (B, H)

    # single-step GRU (PyTorch gate order r, z, n)
    bg = b_gates_ref[...]                                # (2, 3H): [b_ih; b_hh]
    gi = jnp.dot(x, w_ih_ref[...],
                 preferred_element_type=jnp.float32) + bg[0:1, :]        # (B, 3H)
    gh = hidc[:, L:] + bg[1:2, :]                                        # (B, 3H)
    rz = jax.nn.sigmoid(gi[:, :2 * H] + gh[:, :2 * H])   # fused 2H-lane sigmoid
    r = rz[:, :H]
    z = rz[:, H:]
    n = jnp.tanh(gi[:, 2 * H:] + r * gh[:, 2 * H:])
    h_new = (1.0 - z) * n + z * hid                      # (B, H)
    hid_out_ref[...] = h_new

    # output head: log_softmax(Linear_{H->O}(h_new), dim=1)
    logits = jnp.dot(h_new, w_out_ref[...],
                     preferred_element_type=jnp.float32) + b_out_ref[...]  # (B, O)
    m2 = jnp.max(logits, axis=1, keepdims=True)
    sh = logits - m2
    lse = jnp.log(jnp.sum(jnp.exp(sh), axis=1, keepdims=True))
    logp_ref[...] = sh - lse


def init_params(key, hidden_size, output_size, max_length):
    H, O, L = hidden_size, output_size, max_length
    ks = jax.random.split(key, 12)

    def u(k, shape, fan_in):
        bound = 1.0 / (fan_in ** 0.5)
        return jax.random.uniform(k, shape, jnp.float32, -bound, bound)

    return {
        'embedding': jax.random.normal(ks[0], (O, H), jnp.float32),
        'attn_w': u(ks[1], (L, 2 * H), 2 * H), 'attn_b': u(ks[2], (L,), 2 * H),
        'enc_w': u(ks[3], (H, 2 * H), 2 * H), 'enc_b': u(ks[4], (H,), 2 * H),
        'comb_w': u(ks[5], (H, 2 * H), 2 * H), 'comb_b': u(ks[6], (H,), 2 * H),
        'gru_w_ih': u(ks[7], (3 * H, H), H), 'gru_w_hh': u(ks[8], (3 * H, H), H),
        'gru_b_ih': u(ks[9], (3 * H,), H), 'gru_b_hh': u(ks[10], (3 * H,), H),
        'out_w': u(ks[11], (O, H), H), 'out_b': jnp.zeros((O,), jnp.float32),
    }


def prepare_weights(params, hidden_size):
    """One-time (per model) folding / packing so the per-token decode call ships
    only a handful of packed arrays and does no weight reshuffling."""
    H = hidden_size
    E = params['embedding']                               # (O, H)
    w_attn_T = params['attn_w'].T                         # (2H, L)
    w_attn_e, w_attn_h = w_attn_T[:H], w_attn_T[H:]       # (H, L), (H, L)
    w_comb_T = params['comb_w'].T                         # (2H, H)
    w_comb_e, w_comb_a = w_comb_T[:H], w_comb_T[H:]       # (H, H), (H, H)

    # Fold the encoder projection into the combine weight (exact before ReLU;
    # its bias collapses because each softmax row sums to 1).
    w_ctx = params['enc_w'].T @ w_comb_a                  # (2H, H)
    b_comb_f = params['comb_b'] + params['enc_b'] @ w_comb_a   # (H,)

    # Fold the embedding table through its two linear consumers (+ biases):
    # per-token rows, gathered in-kernel with a one-hot matmul.
    tok_tab = jnp.concatenate(
        [E @ w_attn_e + params['attn_b'][None, :],        # (O, L)
         E @ w_comb_e + b_comb_f[None, :]], axis=1)       # (O, L+H)

    hid_pack = jnp.concatenate(
        [w_attn_h, params['gru_w_hh'].T], axis=1)         # (H, L+3H)

    return {
        'tok_tab': tok_tab,                               # (O, L+H)
        'hid_pack': hid_pack,                             # (H, L+3H)
        'w_ctx': w_ctx,                                   # (2H, H)
        'w_ih': params['gru_w_ih'].T,                     # (H, 3H)  gate order r,z,n
        'w_out': params['out_w'].T,                       # (H, O)
        'b_gates': jnp.stack([params['gru_b_ih'], params['gru_b_hh']]),  # (2, 3H)
        'b_out': params['out_b'][None, :],                # (1, O)
    }


@jax.jit
def attn_decoder_forward(prep, input_ids, hidden, encoder_outputs):
    """input_ids: (B,) int32; hidden: (B, 1, H) as passed to the PyTorch forward
    (permuted inside); encoder_outputs: (B, max_length, 2*H)."""
    B, _, H = hidden.shape
    L = encoder_outputs.shape[1]
    O = prep['w_out'].shape[1]

    hid = hidden[:, 0, :]                                 # == permute(1,0,2)[0]
    ids = input_ids.astype(jnp.int32)[:, None]            # (B, 1)

    inputs = (ids, hid, encoder_outputs,
              prep['tok_tab'], prep['hid_pack'], prep['w_ctx'],
              prep['w_ih'], prep['w_out'], prep['b_gates'], prep['b_out'])

    vmem = lambda: pl.BlockSpec(memory_space=pltpu.MemorySpace.VMEM)
    logp, h_new, attn_w = pl.pallas_call(
        attn_decoder_kernel,
        out_shape=(jax.ShapeDtypeStruct((B, O), jnp.float32),
                   jax.ShapeDtypeStruct((B, H), jnp.float32),
                   jax.ShapeDtypeStruct((B, L), jnp.float32)),
        in_specs=[vmem() for _ in inputs],
        out_specs=(vmem(), vmem(), vmem()),
        # hidden-state input (index 1) reuses its HBM buffer for the new hidden
        # state (output index 1) -- stateful decoder, no extra output buffer.
        input_output_aliases={1: 1},
    )(*inputs)

    # PyTorch returns the GRU hidden state as (1, B, H)
    return logp, h_new[None], attn_w


def reference_forward(params, input_ids, hidden, encoder_outputs, hidden_size):
    """Pure-JAX reference mirroring the PyTorch forward (eval mode)."""
    H = hidden_size
    hid = jnp.transpose(hidden, (1, 0, 2))[0]
    emb = params['embedding'][input_ids]
    cat1 = jnp.concatenate([emb, hid], axis=1)
    attn_w = jax.nn.softmax(cat1 @ params['attn_w'].T + params['attn_b'], axis=1)
    enc_proj = encoder_outputs @ params['enc_w'].T + params['enc_b']
    attn_applied = jnp.einsum('bl,blh->bh', attn_w, enc_proj)
    cat2 = jnp.concatenate([emb, attn_applied], axis=1)
    x = jax.nn.relu(cat2 @ params['comb_w'].T + params['comb_b'])
    gi = x @ params['gru_w_ih'].T + params['gru_b_ih']
    gh = hid @ params['gru_w_hh'].T + params['gru_b_hh']
    r = jax.nn.sigmoid(gi[:, :H] + gh[:, :H])
    z = jax.nn.sigmoid(gi[:, H:2 * H] + gh[:, H:2 * H])
    n = jnp.tanh(gi[:, 2 * H:] + r * gh[:, 2 * H:])
    h_new = (1.0 - z) * n + z * hid
    logp = jax.nn.log_softmax(h_new @ params['out_w'].T + params['out_b'], axis=1)
    return logp, h_new[None], attn_w


if __name__ == "__main__":
    hidden_size, output_size, batch_size, max_length = 32, 40, 2, MAX_LENGTH

    key = jax.random.PRNGKey(0)
    k_par, k_in, k_hid, k_enc = jax.random.split(key, 4)
    params = init_params(k_par, hidden_size, output_size, max_length)
    prep = prepare_weights(params, hidden_size)   # hoisted: once per model, not per step

    input_ids = jax.random.randint(k_in, (batch_size,), 0, output_size, dtype=jnp.int32)
    hidden = jax.random.normal(k_hid, (batch_size, 1, hidden_size), dtype=jnp.float32)
    encoder_outputs = jax.random.normal(
        k_enc, (batch_size, max_length, 2 * hidden_size), dtype=jnp.float32)

    logp, h_new, attn_w = attn_decoder_forward(prep, input_ids, hidden, encoder_outputs)
    jax.block_until_ready((logp, h_new, attn_w))

    ref_logp, ref_h, ref_attn = reference_forward(
        params, input_ids, hidden, encoder_outputs, hidden_size)
    assert jnp.allclose(logp, ref_logp, atol=1e-4, rtol=1e-4), "logp mismatch"
    assert jnp.allclose(h_new, ref_h, atol=1e-4, rtol=1e-4), "hidden mismatch"
    assert jnp.allclose(attn_w, ref_attn, atol=1e-4, rtol=1e-4), "attn mismatch"

    print("KERNEL_OK")
</pallas_src>

<mosaic_0001>
module attributes {stable_mosaic.version = 11 : i64} {
  func.func @attn_decoder_kernel(%arg0: memref<2x1xi32, #tpu.memory_space<vmem>>, %arg1: memref<2x32xf32, #tpu.memory_space<vmem>>, %arg2: memref<2x50x64xf32, #tpu.memory_space<vmem>>, %arg3: memref<40x82xf32, #tpu.memory_space<vmem>>, %arg4: memref<32x146xf32, #tpu.memory_space<vmem>>, %arg5: memref<64x32xf32, #tpu.memory_space<vmem>>, %arg6: memref<32x96xf32, #tpu.memory_space<vmem>>, %arg7: memref<32x40xf32, #tpu.memory_space<vmem>>, %arg8: memref<2x96xf32, #tpu.memory_space<vmem>>, %arg9: memref<1x40xf32, #tpu.memory_space<vmem>>, %arg10: memref<2x40xf32, #tpu.memory_space<vmem>>, %arg11: memref<2x32xf32, #tpu.memory_space<vmem>>, %arg12: memref<2x50xf32, #tpu.memory_space<vmem>>) attributes {dimension_semantics = [], scalar_prefetch = 0 : i64, scratch_operands = 0 : i64, tpu.core_type = #tpu.core_type<tc>} {
    %c0 = arith.constant 0 : index
    %c0_0 = arith.constant 0 : index
    %0 = vector.load %arg1[%c0, %c0_0] : memref<2x32xf32, #tpu.memory_space<vmem>>, vector<2x32xf32>
    %1 = tpu.iota {dimensions = array<i32: 1>} : vector<2x40xi32>
    %c0_1 = arith.constant 0 : index
    %c0_2 = arith.constant 0 : index
    %2 = vector.load %arg0[%c0_1, %c0_2] : memref<2x1xi32, #tpu.memory_space<vmem>>, vector<2x1xi32>
    %3 = vector.broadcast %2 : vector<2x1xi32> to vector<2x40xi32>
    %4 = arith.cmpi eq, %1, %3 : vector<2x40xi32>
    %5 = arith.extui %4 : vector<2x40xi1> to vector<2x40xi32>
    %6 = arith.sitofp %5 : vector<2x40xi32> to vector<2x40xf32>
    %c0_3 = arith.constant 0 : index
    %c0_4 = arith.constant 0 : index
    %7 = vector.load %arg3[%c0_3, %c0_4] : memref<40x82xf32, #tpu.memory_space<vmem>>, vector<40x82xf32>
    %cst = arith.constant dense<0.000000e+00> : vector<2x82xf32>
    %8 = tpu.matmul %6, %7, %cst {dimension_numbers = #tpu.dot_dimension_numbers<[1], [0], [0], [1], [0, 0, 1, 1], [], []>} : vector<2x40xf32>, vector<40x82xf32>, vector<2x82xf32> -> vector<2x82xf32>
    %c0_5 = arith.constant 0 : index
    %c0_6 = arith.constant 0 : index
    %9 = vector.load %arg4[%c0_5, %c0_6] : memref<32x146xf32, #tpu.memory_space<vmem>>, vector<32x146xf32>
    %cst_7 = arith.constant dense<0.000000e+00> : vector<2x146xf32>
    %10 = tpu.matmul %0, %9, %cst_7 {dimension_numbers = #tpu.dot_dimension_numbers<[1], [0], [0], [1], [0, 0, 1, 1], [], []>} : vector<2x32xf32>, vector<32x146xf32>, vector<2x146xf32> -> vector<2x146xf32>
    %11 = vector.extract_strided_slice %8 {offsets = [0, 0], sizes = [2, 50], strides = [1, 1]} : vector<2x82xf32> to vector<2x50xf32>
    %12 = vector.extract_strided_slice %10 {offsets = [0, 0], sizes = [2, 50], strides = [1, 1]} : vector<2x146xf32> to vector<2x50xf32>
    %13 = arith.addf %11, %12 : vector<2x50xf32>
    %cst_8 = arith.constant dense<0xFF800000> : vector<2xf32>
    %14 = vector.multi_reduction <maximumf>, %13, %cst_8 [1] : vector<2x50xf32> to vector<2xf32>
    %15 = vector.shape_cast %14 : vector<2xf32> to vector<2x1xf32>
    %16 = vector.broadcast %15 : vector<2x1xf32> to vector<2x50xf32>
    %17 = arith.subf %13, %16 : vector<2x50xf32>
    %18 = math.exp %17 : vector<2x50xf32>
    %cst_9 = arith.constant dense<0.000000e+00> : vector<2xf32>
    %19 = vector.multi_reduction <add>, %18, %cst_9 [1] : vector<2x50xf32> to vector<2xf32>
    %20 = vector.shape_cast %19 : vector<2xf32> to vector<2x1xf32>
    %21 = tpu.reciprocal %20 {approx = true} : vector<2x1xf32> -> vector<2x1xf32>
    %22 = arith.mulf %20, %21 : vector<2x1xf32>
    %cst_10 = arith.constant 2.000000e+00 : f32
    %23 = vector.broadcast %cst_10 : f32 to vector<2x1xf32>
    %24 = arith.subf %23, %22 : vector<2x1xf32>
    %25 = arith.mulf %21, %24 : vector<2x1xf32>
    %26 = vector.broadcast %25 : vector<2x1xf32> to vector<2x50xf32>
    %27 = arith.mulf %18, %26 : vector<2x50xf32>
    %c0_11 = arith.constant 0 : index
    %c0_12 = arith.constant 0 : index
    %28 = vector.load %arg12[%c0_11, %c0_12] : memref<2x50xf32, #tpu.memory_space<vmem>>, vector<2x50xf32>
    tpu.vector_store %arg12[%c0_11, %c0_12], %27 {strides = array<i32>} : memref<2x50xf32, #tpu.memory_space<vmem>>, vector<2x50xf32>,
    %29 = vector.shape_cast %27 : vector<2x50xf32> to vector<2x1x50xf32>
    %c0_13 = arith.constant 0 : index
    %c0_14 = arith.constant 0 : index
    %c0_15 = arith.constant 0 : index
    %30 = vector.load %arg2[%c0_13, %c0_14, %c0_15] : memref<2x50x64xf32, #tpu.memory_space<vmem>>, vector<2x50x64xf32>
    %cst_16 = arith.constant dense<0.000000e+00> : vector<2x1x64xf32>
    %31 = tpu.matmul %29, %30, %cst_16 {dimension_numbers = #tpu.dot_dimension_numbers<[2], [1], [1], [2], [0, 0, 0, 1, 1, 2], [0], [0]>} : vector<2x1x50xf32>, vector<2x50x64xf32>, vector<2x1x64xf32> -> vector<2x1x64xf32>
    %32 = vector.shape_cast %31 : vector<2x1x64xf32> to vector<2x64xf32>
    %33 = vector.extract_strided_slice %8 {offsets = [0, 50], sizes = [2, 32], strides = [1, 1]} : vector<2x82xf32> to vector<2x32xf32>
    %c0_17 = arith.constant 0 : index
    %c0_18 = arith.constant 0 : index
    %34 = vector.load %arg5[%c0_17, %c0_18] : memref<64x32xf32, #tpu.memory_space<vmem>>, vector<64x32xf32>
    %cst_19 = arith.constant dense<0.000000e+00> : vector<2x32xf32>
    %35 = tpu.matmul %32, %34, %cst_19 {dimension_numbers = #tpu.dot_dimension_numbers<[1], [0], [0], [1], [0, 0, 1, 1], [], []>} : vector<2x64xf32>, vector<64x32xf32>, vector<2x32xf32> -> vector<2x32xf32>
    %36 = arith.addf %33, %35 : vector<2x32xf32>
    %cst_20 = arith.constant 0.000000e+00 : f32
    %37 = vector.broadcast %cst_20 : f32 to vector<2x32xf32>
    %38 = arith.maximumf %36, %37 : vector<2x32xf32>
    %c0_21 = arith.constant 0 : index
    %c0_22 = arith.constant 0 : index
    %39 = vector.load %arg8[%c0_21, %c0_22] : memref<2x96xf32, #tpu.memory_space<vmem>>, vector<2x96xf32>
    %c0_23 = arith.constant 0 : index
    %c0_24 = arith.constant 0 : index
    %40 = vector.load %arg6[%c0_23, %c0_24] : memref<32x96xf32, #tpu.memory_space<vmem>>, vector<32x96xf32>
    %cst_25 = arith.constant dense<0.000000e+00> : vector<2x96xf32>
    %41 = tpu.matmul %38, %40, %cst_25 {dimension_numbers = #tpu.dot_dimension_numbers<[1], [0], [0], [1], [0, 0, 1, 1], [], []>} : vector<2x32xf32>, vector<32x96xf32>, vector<2x96xf32> -> vector<2x96xf32>
    %42 = vector.extract_strided_slice %39 {offsets = [0, 0], sizes = [1, 96], strides = [1, 1]} : vector<2x96xf32> to vector<1x96xf32>
    %43 = vector.broadcast %42 : vector<1x96xf32> to vector<2x96xf32>
    %44 = arith.addf %41, %43 : vector<2x96xf32>
    %45 = vector.extract_strided_slice %10 {offsets = [0, 50], sizes = [2, 96], strides = [1, 1]} : vector<2x146xf32> to vector<2x96xf32>
    %46 = vector.extract_strided_slice %39 {offsets = [1, 0], sizes = [1, 96], strides = [1, 1]} : vector<2x96xf32> to vector<1x96xf32>
    %47 = vector.broadcast %46 : vector<1x96xf32> to vector<2x96xf32>
    %48 = arith.addf %45, %47 : vector<2x96xf32>
    %49 = vector.extract_strided_slice %44 {offsets = [0, 0], sizes = [2, 64], strides = [1, 1]} : vector<2x96xf32> to vector<2x64xf32>
    %50 = vector.extract_strided_slice %48 {offsets = [0, 0], sizes = [2, 64], strides = [1, 1]} : vector<2x96xf32> to vector<2x64xf32>
    %51 = arith.addf %49, %50 : vector<2x64xf32>
    %52 = arith.negf %51 : vector<2x64xf32>
    %53 = math.exp %52 : vector<2x64xf32>
    %cst_26 = arith.constant 1.000000e+00 : f32
    %54 = vector.broadcast %cst_26 : f32 to vector<2x64xf32>
    %55 = arith.addf %54, %53 : vector<2x64xf32>
    %56 = arith.divf %54, %55 : vector<2x64xf32>
    %57 = vector.extract_strided_slice %56 {offsets = [0, 0], sizes = [2, 32], strides = [1, 1]} : vector<2x64xf32> to vector<2x32xf32>
    %58 = vector.extract_strided_slice %56 {offsets = [0, 32], sizes = [2, 32], strides = [1, 1]} : vector<2x64xf32> to vector<2x32xf32>
    %59 = vector.extract_strided_slice %44 {offsets = [0, 64], sizes = [2, 32], strides = [1, 1]} : vector<2x96xf32> to vector<2x32xf32>
    %60 = vector.extract_strided_slice %48 {offsets = [0, 64], sizes = [2, 32], strides = [1, 1]} : vector<2x96xf32> to vector<2x32xf32>
    %61 = arith.mulf %57, %60 : vector<2x32xf32>
    %62 = arith.addf %59, %61 : vector<2x32xf32>
    %63 = math.tanh %62 : vector<2x32xf32>
    %cst_27 = arith.constant 1.000000e+00 : f32
    %64 = vector.broadcast %cst_27 : f32 to vector<2x32xf32>
    %65 = arith.subf %64, %58 : vector<2x32xf32>
    %66 = arith.mulf %65, %63 : vector<2x32xf32>
    %67 = arith.mulf %58, %0 : vector<2x32xf32>
    %68 = arith.addf %66, %67 : vector<2x32xf32>
    %c0_28 = arith.constant 0 : index
    %c0_29 = arith.constant 0 : index
    %69 = vector.load %arg11[%c0_28, %c0_29] : memref<2x32xf32, #tpu.memory_space<vmem>>, vector<2x32xf32>
    tpu.vector_store %arg11[%c0_28, %c0_29], %68 {strides = array<i32>} : memref<2x32xf32, #tpu.memory_space<vmem>>, vector<2x32xf32>,
    %c0_30 = arith.constant 0 : index
    %c0_31 = arith.constant 0 : index
    %70 = vector.load %arg7[%c0_30, %c0_31] : memref<32x40xf32, #tpu.memory_space<vmem>>, vector<32x40xf32>
    %cst_32 = arith.constant dense<0.000000e+00> : vector<2x40xf32>
    %71 = tpu.matmul %68, %70, %cst_32 {dimension_numbers = #tpu.dot_dimension_numbers<[1], [0], [0], [1], [0, 0, 1, 1], [], []>} : vector<2x32xf32>, vector<32x40xf32>, vector<2x40xf32> -> vector<2x40xf32>
    %c0_33 = arith.constant 0 : index
    %c0_34 = arith.constant 0 : index
    %72 = vector.load %arg9[%c0_33, %c0_34] : memref<1x40xf32, #tpu.memory_space<vmem>>, vector<1x40xf32>
    %73 = vector.broadcast %72 : vector<1x40xf32> to vector<2x40xf32>
    %74 = arith.addf %71, %73 : vector<2x40xf32>
    %cst_35 = arith.constant dense<0xFF800000> : vector<2xf32>
    %75 = vector.multi_reduction <maximumf>, %74, %cst_35 [1] : vector<2x40xf32> to vector<2xf32>
    %76 = vector.shape_cast %75 : vector<2xf32> to vector<2x1xf32>
    %77 = vector.broadcast %76 : vector<2x1xf32> to vector<2x40xf32>
    %78 = arith.subf %74, %77 : vector<2x40xf32>
    %79 = math.exp %78 : vector<2x40xf32>
    %cst_36 = arith.constant dense<0.000000e+00> : vector<2xf32>
    %80 = vector.multi_reduction <add>, %79, %cst_36 [1] : vector<2x40xf32> to vector<2xf32>
    %81 = vector.shape_cast %80 : vector<2xf32> to vector<2x1xf32>
    %82 = math.log %81 : vector<2x1xf32>
    %83 = vector.broadcast %82 : vector<2x1xf32> to vector<2x40xf32>
    %84 = arith.subf %78, %83 : vector<2x40xf32>
    %c0_37 = arith.constant 0 : index
    %c0_38 = arith.constant 0 : index
    %85 = vector.load %arg10[%c0_37, %c0_38] : memref<2x40xf32, #tpu.memory_space<vmem>>, vector<2x40xf32>
    tpu.vector_store %arg10[%c0_37, %c0_38], %84 {strides = array<i32>} : memref<2x40xf32, #tpu.memory_space<vmem>>, vector<2x40xf32>,
    return
  }
}

</mosaic_0001>

<llo_original>
// kernel: attn_decoder_forward.1
$region0: #{attn_decoder_forward.1}
  #allocation0 [shape = 'u32[]', space=smem, size = 0x4, offset = 0x4, fixed_abs, tag = 'smem constant byte address 0x4 - core index']
  #allocation1 [shape = 'u32[144,128]{1,0:T(1,128)}', space=vmem, size = 0x12000, scoped, tag = 'internal scratch']
  %s0 = inlined_call_operand.vmem [shape: s32[2,1], index: 0, kind: input, shape index: {}]
  %s1 = inlined_call_operand.vmem [shape: f32[2,32], index: 1, kind: input, shape index: {}, may-alias: {1,11}]
  %s2 = inlined_call_operand.vmem [shape: f32[2,50,64], index: 2, kind: input, shape index: {}]
  %s3 = inlined_call_operand.vmem [shape: f32[40,82], index: 3, kind: input, shape index: {}]
  %s4 = inlined_call_operand.vmem [shape: f32[32,146], index: 4, kind: input, shape index: {}]
  %s5 = inlined_call_operand.vmem [shape: f32[64,32], index: 5, kind: input, shape index: {}]
  %s6 = inlined_call_operand.vmem [shape: f32[32,96], index: 6, kind: input, shape index: {}]
  %s7 = inlined_call_operand.vmem [shape: f32[32,40], index: 7, kind: input, shape index: {}]
  %s8 = inlined_call_operand.vmem [shape: f32[2,96], index: 8, kind: input, shape index: {}]
  %s9 = inlined_call_operand.vmem [shape: f32[1,40], index: 9, kind: input, shape index: {}]
  %s10 = inlined_call_operand.hbm [shape: f32[2,40], index: 10, kind: output, shape index: {0}]
  %s11 = inlined_call_operand.vmem [shape: f32[2,32], index: 11, kind: output, shape index: {1}, may-alias: {1,11}]
  %s12 = inlined_call_operand.hbm [shape: f32[2,50], index: 12, kind: output, shape index: {2}]
  %13 = xla_tuple %s10, %s11, %s12
  %s14 = sld [smem:[#allocation0]]
  $region66: #{attn_decoder_forward.1} parent=0
    _
  %s16 = ssub.s32 1, %s14
  %s17 = scalar_select 0, %s16, %s14
  $region1: #{attn_decoder_forward.1} parent=0
    #allocation2 [shape = 'u8[1024]{0}', space=vmem, size = 0x400, scoped, tag = 'output window, operand 0, single buffered']
    #allocation3 [shape = 's32[1]{0}', space=sflag, size = 0x4, scoped, tag = 'scoped memory for attn_decoder_forward.1']
    #allocation4 [shape = 'u8[1024]{0}', space=vmem, size = 0x400, scoped, tag = 'output window, operand 2, single buffered']
    #allocation5 [shape = 's32[1]{0}', space=sflag, size = 0x4, scoped, tag = 'scoped memory for attn_decoder_forward.1']
    %18 = vsyncpa [#allocation3], 0
    %19 = vsyncpa [#allocation5], 0
    // Predicated region
    $region2: #{attn_decoder_forward.1} parent=1 // pred_check
      _
    $region3: #{attn_decoder_forward.1} parent=1 // pred_check_branch
      %21 = sbr.rel (0) target = $region5
    $region4: #{attn_decoder_forward.1} parent=1 // pred_region
      _
    $region5: #{attn_decoder_forward.1} parent=1 // pred_fallthru
      _
    // Predicated region
    $region6: #{attn_decoder_forward.1} parent=1 // pred_check
      _
    $region7: #{attn_decoder_forward.1} parent=1 // pred_check_branch
      %23 = sbr.rel (0) target = $region9
    $region8: #{attn_decoder_forward.1} parent=1 // pred_region
      _
    $region9: #{attn_decoder_forward.1} parent=1 // pred_fallthru
      _
    // Predicated region
    $region10: #{attn_decoder_forward.1} parent=1 // pred_check
      _
    $region11: #{attn_decoder_forward.1} parent=1 // pred_check_branch
      %25 = sbr.rel (0) target = $region13
    $region12: #{attn_decoder_forward.1} parent=1 // pred_region
      _
    $region13: #{attn_decoder_forward.1} parent=1 // pred_fallthru
      _
    // Predicated region
    $region14: #{attn_decoder_forward.1} parent=1 // pred_check
      _
    $region15: #{attn_decoder_forward.1} parent=1 // pred_check_branch
      %27 = sbr.rel (0) target = $region17
    $region16: #{attn_decoder_forward.1} parent=1 // pred_region
      _
    $region17: #{attn_decoder_forward.1} parent=1 // pred_fallthru
      _
    // Predicated region
    $region18: #{attn_decoder_forward.1} parent=1 // pred_check
      _
    $region19: #{attn_decoder_forward.1} parent=1 // pred_check_branch
      %29 = sbr.rel (0) target = $region21
    $region20: #{attn_decoder_forward.1} parent=1 // pred_region
      _
    $region21: #{attn_decoder_forward.1} parent=1 // pred_fallthru
      _
    // Predicated region
    $region22: #{attn_decoder_forward.1} parent=1 // pred_check
      _
    $region23: #{attn_decoder_forward.1} parent=1 // pred_check_branch
      %31 = sbr.rel (0) target = $region25
    $region24: #{attn_decoder_forward.1} parent=1 // pred_region
      _
    $region25: #{attn_decoder_forward.1} parent=1 // pred_fallthru
      _
    // Predicated region
    $region26: #{attn_decoder_forward.1} parent=1 // pred_check
      _
    $region27: #{attn_decoder_forward.1} parent=1 // pred_check_branch
      %33 = sbr.rel (0) target = $region29
    $region28: #{attn_decoder_forward.1} parent=1 // pred_region
      _
    $region29: #{attn_decoder_forward.1} parent=1 // pred_fallthru
      _
    // Predicated region
    $region30: #{attn_decoder_forward.1} parent=1 // pred_check
      _
    $region31: #{attn_decoder_forward.1} parent=1 // pred_check_branch
      %35 = sbr.rel (0) target = $region33
    $region32: #{attn_decoder_forward.1} parent=1 // pred_region
      _
    $region33: #{attn_decoder_forward.1} parent=1 // pred_fallthru
      _
    // Predicated region
    $region34: #{attn_decoder_forward.1} parent=1 // pred_check
      _
    $region35: #{attn_decoder_forward.1} parent=1 // pred_check_branch
      %37 = sbr.rel (0) target = $region37
    $region36: #{attn_decoder_forward.1} parent=1 // pred_region
      _
    $region37: #{attn_decoder_forward.1} parent=1 // pred_fallthru
      _
    // Predicated region
    $region38: #{attn_decoder_forward.1} parent=1 // pred_check
      _
    $region39: #{attn_decoder_forward.1} parent=1 // pred_check_branch
      %39 = sbr.rel (0) target = $region41
    $region40: #{attn_decoder_forward.1} parent=1 // pred_region
      _
    $region41: #{attn_decoder_forward.1} parent=1 // pred_fallthru
      _
    %v40 = vld [vmem:[%s1] sm:$0x3]
    %v41 = vlaneseq
    %v42 = vand.u32 %v41, 127
    %v43 = vld [vmem:[%s0] sm:$0x3]
    %44 = vset.pattern.permute.xlu0 0
    %45 = vperm.xlu0 %44, %v43
    %v46 = vpop.permute.xlu0 %45
    %vm47 = vcmp.eq.s32.totalorder %v42, %v46
    %v48 = vsel %vm47, 1, 0
    %v49 = vcvt.s32.f32 %v48
    %v50 = vld [vmem:[%s3] sm:$0xff]
    %v51 = vld [vmem:[%s3 + $0x8] sm:$0xff]
    %v52 = vld [vmem:[%s3 + $0x10] sm:$0xff]
    %v53 = vld [vmem:[%s3 + $0x18] sm:$0xff]
    %v54 = vld [vmem:[%s3 + $0x20] sm:$0xff]
    %vm55 = vcmask 326656
    %v57 = vsel %vm55, %v49, 0
    %59 = vmatprep.subr.mxu0 0.0
    %60 = vmatpush1.msra.mxu0 0.0
    %61 = vmatprep.subr.mxu0 0.0
    %62 = vmatpush1.msra.mxu0 0.0
    %63 = vmatprep.subr.mxu0 0.0
    %64 = vmatpush1.msra.mxu0 0.0
    %65 = vmatprep.subr.mxu0 0.0
    %66 = vmatpush1.msra.mxu0 0.0
    %67 = vmatprep.subr.mxu0 0.0
    %68 = vmatpush1.msra.mxu0 0.0
    %69 = vmatprep.subr.mxu0 0.0
    %70 = vmatpush1.msra.mxu0 0.0
    %71 = vmatprep.subr.mxu0 0.0
    %72 = vmatpush1.msra.mxu0 0.0
    %73 = vmatprep.subr.mxu0 0.0
    %74 = vmatpush1.msra.mxu0 0.0
    %75 = vmatprep.subr.mxu0 0.0
    %76 = vmatpush1.msra.mxu0 0.0
    %77 = vmatprep.subr.mxu0 0.0
    %78 = vmatpush1.msra.mxu0 0.0
    %79 = vmatprep.subr.mxu0 0.0
    %80 = vmatpush1.msra.mxu0 0.0
    %81 = vmatprep.subr.mxu0 0.0
    %82 = vmatpush1.msra.mxu0 %v54
    %83 = vmatprep.subr.mxu0 0.0
    %84 = vmatpush1.msra.mxu0 %v53
    %85 = vmatprep.subr.mxu0 0.0
    %86 = vmatpush1.msra.mxu0 %v52
    %87 = vmatprep.subr.mxu0 0.0
    %88 = vmatpush1.msra.mxu0 %v51
    %89 = vmatprep.subr.mxu0 0.0
    %90 = vmatpush1.msra.mxu0 %v50
    %91 = vmatprep.subr.mxu0 0.0
    %92 = vmatpush2.msra.mxu0 0.0
    %93 = vmatprep.subr.mxu0 0.0
    %94 = vmatpush2.msra.mxu0 0.0
    %95 = vmatprep.subr.mxu0 0.0
    %96 = vmatpush2.msra.mxu0 0.0
    %97 = vmatprep.subr.mxu0 0.0
    %98 = vmatpush2.msra.mxu0 0.0
    %99 = vmatprep.subr.mxu0 0.0
    %100 = vmatpush2.msra.mxu0 0.0
    %101 = vmatprep.subr.mxu0 0.0
    %102 = vmatpush2.msra.mxu0 0.0
    %103 = vmatprep.subr.mxu0 0.0
    %104 = vmatpush2.msra.mxu0 0.0
    %105 = vmatprep.subr.mxu0 0.0
    %106 = vmatpush2.msra.mxu0 0.0
    %107 = vmatprep.subr.mxu0 0.0
    %108 = vmatpush2.msra.mxu0 0.0
    %109 = vmatprep.subr.mxu0 0.0
    %110 = vmatpush2.msra.mxu0 0.0
    %111 = vmatprep.subr.mxu0 0.0
    %112 = vmatpush2.msra.mxu0 0.0
    %113 = vmatprep.subr.mxu0 0.0
    %114 = vmatpush2.msra.mxu0 0.0
    %115 = vmatprep.subr.mxu0 0.0
    %116 = vmatpush2.msra.mxu0 0.0
    %117 = vmatprep.subr.mxu0 0.0
    %118 = vmatpush2.msra.mxu0 0.0
    %119 = vmatprep.subr.mxu0 0.0
    %120 = vmatpush2.msra.mxu0 0.0
    %121 = vmatprep.subr.mxu0 0.0
    %122 = vmatpush2.msra.mxu0 0.0
    %123 = vmatprep.mubr.f32.mxu0 0.0
    %124 = vmatmul.mubr.f32.gmra.mxu0 %v57
    %v125 = vpop.f32.mrf.mxu0
    %v126 = vadd.f32 0.0, %v125
    %v127 = vpop.f32.mrf.mxu0
    %128 = vdwg.mxu0
    %v129 = vld [vmem:[%s4] sm:$0xff]
    %v130 = vld [vmem:[%s4 + $0x8] sm:$0xff]
    %v131 = vld [vmem:[%s4 + $0x10] sm:$0xff]
    %v132 = vld [vmem:[%s4 + $0x18] sm:$0xff]
    %v133 = vld [vmem:[%s4 + $0x20] sm:$0xff]
    %v134 = vld [vmem:[%s4 + $0x28] sm:$0xff]
    %v135 = vld [vmem:[%s4 + $0x30] sm:$0xff]
    %v136 = vld [vmem:[%s4 + $0x38] sm:$0xff]
    %vm137 = vcmask 261120
    %v139 = vsel %vm137, %v40, 0
    %141 = vmatprep.subr.mxu0 0.0
    %142 = vmatpush1.msra.mxu0 0.0
    %143 = vmatprep.subr.mxu0 0.0
    %144 = vmatpush1.msra.mxu0 0.0
    %145 = vmatprep.subr.mxu0 0.0
    %146 = vmatpush1.msra.mxu0 0.0
    %147 = vmatprep.subr.mxu0 0.0
    %148 = vmatpush1.msra.mxu0 0.0
    %149 = vmatprep.subr.mxu0 0.0
    %150 = vmatpush1.msra.mxu0 0.0
    %151 = vmatprep.subr.mxu0 0.0
    %152 = vmatpush1.msra.mxu0 0.0
    %153 = vmatprep.subr.mxu0 0.0
    %154 = vmatpush1.msra.mxu0 0.0
    %155 = vmatprep.subr.mxu0 0.0
    %156 = vmatpush1.msra.mxu0 0.0
    %157 = vmatprep.subr.mxu0 0.0
    %158 = vmatpush1.msra.mxu0 0.0
    %159 = vmatprep.subr.mxu0 0.0
    %160 = vmatpush1.msra.mxu0 0.0
    %161 = vmatprep.subr.mxu0 0.0
    %162 = vmatpush1.msra.mxu0 0.0
    %163 = vmatprep.subr.mxu0 0.0
    %164 = vmatpush1.msra.mxu0 0.0
    %165 = vmatprep.subr.mxu0 %v136
    %166 = vmatpush1.msra.mxu0 %v135
    %167 = vmatprep.subr.mxu0 %v134
    %168 = vmatpush1.msra.mxu0 %v133
    %169 = vmatprep.subr.mxu0 %v132
    %170 = vmatpush1.msra.mxu0 %v131
    %171 = vmatprep.subr.mxu0 %v130
    %172 = vmatpush1.msra.mxu0 %v129
    %173 = vmatprep.subr.mxu0 0.0
    %174 = vmatpush2.msra.mxu0 0.0
    %175 = vmatprep.subr.mxu0 0.0
    %176 = vmatpush2.msra.mxu0 0.0
    %177 = vmatprep.subr.mxu0 0.0
    %178 = vmatpush2.msra.mxu0 0.0
    %179 = vmatprep.subr.mxu0 0.0
    %180 = vmatpush2.msra.mxu0 0.0
    %181 = vmatprep.subr.mxu0 0.0
    %182 = vmatpush2.msra.mxu0 0.0
    %183 = vmatprep.subr.mxu0 0.0
    %184 = vmatpush2.msra.mxu0 0.0
    %185 = vmatprep.subr.mxu0 0.0
    %186 = vmatpush2.msra.mxu0 0.0
    %187 = vmatprep.subr.mxu0 0.0
    %188 = vmatpush2.msra.mxu0 0.0
    %189 = vmatprep.subr.mxu0 0.0
    %190 = vmatpush2.msra.mxu0 0.0
    %191 = vmatprep.subr.mxu0 0.0
    %192 = vmatpush2.msra.mxu0 0.0
    %193 = vmatprep.subr.mxu0 0.0
    %194 = vmatpush2.msra.mxu0 0.0
    %195 = vmatprep.subr.mxu0 0.0
    %196 = vmatpush2.msra.mxu0 0.0
    %197 = vmatprep.subr.mxu0 0.0
    %198 = vmatpush2.msra.mxu0 0.0
    %199 = vmatprep.subr.mxu0 0.0
    %200 = vmatpush2.msra.mxu0 0.0
    %201 = vmatprep.subr.mxu0 0.0
    %202 = vmatpush2.msra.mxu0 0.0
    %203 = vmatprep.subr.mxu0 0.0
    %204 = vmatpush2.msra.mxu0 0.0
    %205 = vmatprep.mubr.f32.mxu0 0.0
    %206 = vmatmul.mubr.f32.gmra.mxu0 %v139
    %v207 = vpop.f32.mrf.mxu0
    %v208 = vadd.f32 0.0, %v207
    %v209 = vpop.f32.mrf.mxu0
    %v210 = vadd.f32 0.0, %v209
    %211 = vdwg.mxu0
    %v212 = vadd.f32 %v126, %v208
    %vm213 = vcmask 402432
    %v214 = vsel %vm213, %v212, -inf
    %215 = vmax.xlane.f32.xlu0 %v214
    %v216 = vpop.xlane.xlu0 %215
    %v217 = vsub.f32 %v212, %v216
    %v218 = vmul.f32 %v217, 1.442695
    %v219 = vpow.pop %v218
    %v220 = vsel %vm213, %v219, 0.0
    %221 = vadd.xlane.f32.xlu0 %v220
    %v222 = vpop.xlane.xlu0 %221
    %v223 = vrcp.pop %v222
    %v224 = vmul.f32 %v222, %v223
    %v225 = vsub.f32 2.0, %v224
    %v226 = vmul.f32 %v223, %v225
    %v227 = vmul.f32 %v219, %v226
    %228 = vst.msk [vmem:[#allocation4] sm:$0x3] %vm213, %v227
    %v231 = vunpack.c.l.s4 1966171168
    %v232 = vunpack.c.0.s8 %v231
    %v233 = vlaneseq
    %v234 = vshrl.u32 %v233, 7
    %v235 = vsub.s32 %v232, %v234
    %v236 = vrot.slane %v227, %v235
    %v237 = vcombine.high %v236, %v236
    %v239 = vunpack.c.l.s4 1966171168
    %v240 = vunpack.c.0.s8 %v239
    %v241 = vlaneseq
    %v242 = vshrl.u32 %v241, 7
    %v243 = vsub.s32 %v240, %v242
    %v244 = vrot.slane %v236, %v243
    %v246 = vunpack.c.l.s4 1966171168
    %v247 = vunpack.c.0.s8 %v246
    %v248 = vlaneseq
    %v249 = vshrl.u32 %v248, 7
    %v250 = vsub.s32 %v247, %v249
    %v251 = vrot.slane %v237, %v250
    %v252 = vld [vmem:[%s2] sm:$0xff]
    %v253 = vld [vmem:[%s2 + $0x8] sm:$0xff]
    %v254 = vld [vmem:[%s2 + $0x10] sm:$0xff]
    %v255 = vld [vmem:[%s2 + $0x18] sm:$0xff]
    %v256 = vld [vmem:[%s2 + $0x20] sm:$0xff]
    %v257 = vld [vmem:[%s2 + $0x28] sm:$0xff]
    %v258 = vld [vmem:[%s2 + $0x30] sm:$0x3]
    %v259 = vld [vmem:[%s2 + $0x38] sm:$0xff]
    %v260 = vld [vmem:[%s2 + $0x40] sm:$0xff]
    %v261 = vld [vmem:[%s2 + $0x48] sm:$0xff]
    %v262 = vld [vmem:[%s2 + $0x50] sm:$0xff]
    %v263 = vld [vmem:[%s2 + $0x58] sm:$0xff]
    %v264 = vld [vmem:[%s2 + $0x60] sm:$0xff]
    %v265 = vld [vmem:[%s2 + $0x68] sm:$0x3]
    %vm266 = vcmask 408576
    %v267 = vsel %vm266, %v244, 0
    %vm269 = vcmask 1041408
    %v271 = vsel %vm269, %v258, 0
    %273 = vmatprep.subr.mxu0 0.0
    %274 = vmatpush1.msra.mxu0 0.0
    %275 = vmatprep.subr.mxu0 0.0
    %276 = vmatpush1.msra.mxu0 0.0
    %277 = vmatprep.subr.mxu0 0.0
    %278 = vmatpush1.msra.mxu0 0.0
    %279 = vmatprep.subr.mxu0 0.0
    %280 = vmatpush1.msra.mxu0 0.0
    %281 = vmatprep.subr.mxu0 0.0
    %282 = vmatpush1.msra.mxu0 0.0
    %283 = vmatprep.subr.mxu0 0.0
    %284 = vmatpush1.msra.mxu0 0.0
    %285 = vmatprep.subr.mxu0 0.0
    %286 = vmatpush1.msra.mxu0 0.0
    %287 = vmatprep.subr.mxu0 0.0
    %288 = vmatpush1.msra.mxu0 0.0
    %289 = vmatprep.subr.mxu0 0.0
    %290 = vmatpush1.msra.mxu0 0.0
    %291 = vmatprep.subr.mxu0 0.0
    %292 = vmatpush1.msra.mxu0 %v271
    %293 = vmatprep.subr.mxu0 0.0
    %294 = vmatpush1.msra.mxu0 %v257
    %295 = vmatprep.subr.mxu0 0.0
    %296 = vmatpush1.msra.mxu0 %v256
    %297 = vmatprep.subr.mxu0 0.0
    %298 = vmatpush1.msra.mxu0 %v255
    %299 = vmatprep.subr.mxu0 0.0
    %300 = vmatpush1.msra.mxu0 %v254
    %301 = vmatprep.subr.mxu0 0.0
    %302 = vmatpush1.msra.mxu0 %v253
    %303 = vmatprep.subr.mxu0 0.0
    %304 = vmatpush1.msra.mxu0 %v252
    %305 = vmatprep.subr.mxu0 0.0
    %306 = vmatpush2.msra.mxu0 0.0
    %307 = vmatprep.subr.mxu0 0.0
    %308 = vmatpush2.msra.mxu0 0.0
    %309 = vmatprep.subr.mxu0 0.0
    %310 = vmatpush2.msra.mxu0 0.0
    %311 = vmatprep.subr.mxu0 0.0
    %312 = vmatpush2.msra.mxu0 0.0
    %313 = vmatprep.subr.mxu0 0.0
    %314 = vmatpush2.msra.mxu0 0.0
    %315 = vmatprep.subr.mxu0 0.0
    %316 = vmatpush2.msra.mxu0 0.0
    %317 = vmatprep.subr.mxu0 0.0
    %318 = vmatpush2.msra.mxu0 0.0
    %319 = vmatprep.subr.mxu0 0.0
    %320 = vmatpush2.msra.mxu0 0.0
    %321 = vmatprep.subr.mxu0 0.0
    %322 = vmatpush2.msra.mxu0 0.0
    %323 = vmatprep.subr.mxu0 0.0
    %324 = vmatpush2.msra.mxu0 0.0
    %325 = vmatprep.subr.mxu0 0.0
    %326 = vmatpush2.msra.mxu0 0.0
    %327 = vmatprep.subr.mxu0 0.0
    %328 = vmatpush2.msra.mxu0 0.0
    %329 = vmatprep.subr.mxu0 0.0
    %330 = vmatpush2.msra.mxu0 0.0
    %331 = vmatprep.subr.mxu0 0.0
    %332 = vmatpush2.msra.mxu0 0.0
    %333 = vmatprep.subr.mxu0 0.0
    %334 = vmatpush2.msra.mxu0 0.0
    %335 = vmatprep.subr.mxu0 0.0
    %336 = vmatpush2.msra.mxu0 0.0
    %337 = vmatprep.mubr.f32.mxu0 0.0
    %338 = vmatmul.mubr.f32.gmra.mxu0 %v267
    %v339 = vpop.f32.mrf.mxu0
    %v340 = vadd.f32 0.0, %v339
    %v341 = vpop.f32.mrf.mxu0
    %342 = vdwg.mxu0
    %v343 = vsel %vm266, %v251, 0
    %v346 = vsel %vm269, %v265, 0
    %348 = vmatprep.subr.mxu0 0.0
    %349 = vmatpush1.msra.mxu0 0.0
    %350 = vmatprep.subr.mxu0 0.0
    %351 = vmatpush1.msra.mxu0 0.0
    %352 = vmatprep.subr.mxu0 0.0
    %353 = vmatpush1.msra.mxu0 0.0
    %354 = vmatprep.subr.mxu0 0.0
    %355 = vmatpush1.msra.mxu0 0.0
    %356 = vmatprep.subr.mxu0 0.0
    %357 = vmatpush1.msra.mxu0 0.0
    %358 = vmatprep.subr.mxu0 0.0
    %359 = vmatpush1.msra.mxu0 0.0
    %360 = vmatprep.subr.mxu0 0.0
    %361 = vmatpush1.msra.mxu0 0.0
    %362 = vmatprep.subr.mxu0 0.0
    %363 = vmatpush1.msra.mxu0 0.0
    %364 = vmatprep.subr.mxu0 0.0
    %365 = vmatpush1.msra.mxu0 0.0
    %366 = vmatprep.subr.mxu0 0.0
    %367 = vmatpush1.msra.mxu0 %v346
    %368 = vmatprep.subr.mxu0 0.0
    %369 = vmatpush1.msra.mxu0 %v264
    %370 = vmatprep.subr.mxu0 0.0
    %371 = vmatpush1.msra.mxu0 %v263
    %372 = vmatprep.subr.mxu0 0.0
    %373 = vmatpush1.msra.mxu0 %v262
    %374 = vmatprep.subr.mxu0 0.0
    %375 = vmatpush1.msra.mxu0 %v261
    %376 = vmatprep.subr.mxu0 0.0
    %377 = vmatpush1.msra.mxu0 %v260
    %378 = vmatprep.subr.mxu0 0.0
    %379 = vmatpush1.msra.mxu0 %v259
    %380 = vmatprep.subr.mxu0 0.0
    %381 = vmatpush2.msra.mxu0 0.0
    %382 = vmatprep.subr.mxu0 0.0
    %383 = vmatpush2.msra.mxu0 0.0
    %384 = vmatprep.subr.mxu0 0.0
    %385 = vmatpush2.msra.mxu0 0.0
    %386 = vmatprep.subr.mxu0 0.0
    %387 = vmatpush2.msra.mxu0 0.0
    %388 = vmatprep.subr.mxu0 0.0
    %389 = vmatpush2.msra.mxu0 0.0
    %390 = vmatprep.subr.mxu0 0.0
    %391 = vmatpush2.msra.mxu0 0.0
    %392 = vmatprep.subr.mxu0 0.0
    %393 = vmatpush2.msra.mxu0 0.0
    %394 = vmatprep.subr.mxu0 0.0
    %395 = vmatpush2.msra.mxu0 0.0
    %396 = vmatprep.subr.mxu0 0.0
    %397 = vmatpush2.msra.mxu0 0.0
    %398 = vmatprep.subr.mxu0 0.0
    %399 = vmatpush2.msra.mxu0 0.0
    %400 = vmatprep.subr.mxu0 0.0
    %401 = vmatpush2.msra.mxu0 0.0
    %402 = vmatprep.subr.mxu0 0.0
    %403 = vmatpush2.msra.mxu0 0.0
    %404 = vmatprep.subr.mxu0 0.0
    %405 = vmatpush2.msra.mxu0 0.0
    %406 = vmatprep.subr.mxu0 0.0
    %407 = vmatpush2.msra.mxu0 0.0
    %408 = vmatprep.subr.mxu0 0.0
    %409 = vmatpush2.msra.mxu0 0.0
    %410 = vmatprep.subr.mxu0 0.0
    %411 = vmatpush2.msra.mxu0 0.0
    %412 = vmatprep.mubr.f32.mxu0 0.0
    %413 = vmatmul.mubr.f32.gmra.mxu0 %v343
    %v414 = vpop.f32.mrf.mxu0
    %v415 = vadd.f32 0.0, %v414
    %v416 = vpop.f32.mrf.mxu0
    %417 = vdwg.mxu0
    %v418 = vld [vmem:[%s5] sm:$0xff]
    %v419 = vld [vmem:[%s5 + $0x8] sm:$0xff]
    %v420 = vld [vmem:[%s5 + $0x10] sm:$0xff]
    %v421 = vld [vmem:[%s5 + $0x18] sm:$0xff]
    %v422 = vld [vmem:[%s5 + $0x20] sm:$0xff]
    %v423 = vld [vmem:[%s5 + $0x28] sm:$0xff]
    %v424 = vld [vmem:[%s5 + $0x30] sm:$0xff]
    %v425 = vld [vmem:[%s5 + $0x38] sm:$0xff]
    %v428 = vrot.slane %v415, 7
    %vm429 = vcmask 1041409
    %v430 = vsel %vm429, %v428, %v340
    %vm431 = vcmask 523264
    %v432 = vsel %vm431, %v430, 0
    %434 = vmatprep.subr.mxu0 0.0
    %435 = vmatpush1.msra.mxu0 0.0
    %436 = vmatprep.subr.mxu0 0.0
    %437 = vmatpush1.msra.mxu0 0.0
    %438 = vmatprep.subr.mxu0 0.0
    %439 = vmatpush1.msra.mxu0 0.0
    %440 = vmatprep.subr.mxu0 0.0
    %441 = vmatpush1.msra.mxu0 0.0
    %442 = vmatprep.subr.mxu0 0.0
    %443 = vmatpush1.msra.mxu0 0.0
    %444 = vmatprep.subr.mxu0 0.0
    %445 = vmatpush1.msra.mxu0 0.0
    %446 = vmatprep.subr.mxu0 0.0
    %447 = vmatpush1.msra.mxu0 0.0
    %448 = vmatprep.subr.mxu0 0.0
    %449 = vmatpush1.msra.mxu0 0.0
    %450 = vmatprep.subr.mxu0 0.0
    %451 = vmatpush1.msra.mxu0 %v425
    %452 = vmatprep.subr.mxu0 0.0
    %453 = vmatpush1.msra.mxu0 %v424
    %454 = vmatprep.subr.mxu0 0.0
    %455 = vmatpush1.msra.mxu0 %v423
    %456 = vmatprep.subr.mxu0 0.0
    %457 = vmatpush1.msra.mxu0 %v422
    %458 = vmatprep.subr.mxu0 0.0
    %459 = vmatpush1.msra.mxu0 %v421
    %460 = vmatprep.subr.mxu0 0.0
    %461 = vmatpush1.msra.mxu0 %v420
    %462 = vmatprep.subr.mxu0 0.0
    %463 = vmatpush1.msra.mxu0 %v419
    %464 = vmatprep.subr.mxu0 0.0
    %465 = vmatpush1.msra.mxu0 %v418
    %466 = vmatprep.subr.mxu0 0.0
    %467 = vmatpush2.msra.mxu0 0.0
    %468 = vmatprep.subr.mxu0 0.0
    %469 = vmatpush2.msra.mxu0 0.0
    %470 = vmatprep.subr.mxu0 0.0
    %471 = vmatpush2.msra.mxu0 0.0
    %472 = vmatprep.subr.mxu0 0.0
    %473 = vmatpush2.msra.mxu0 0.0
    %474 = vmatprep.subr.mxu0 0.0
    %475 = vmatpush2.msra.mxu0 0.0
    %476 = vmatprep.subr.mxu0 0.0
    %477 = vmatpush2.msra.mxu0 0.0
    %478 = vmatprep.subr.mxu0 0.0
    %479 = vmatpush2.msra.mxu0 0.0
    %480 = vmatprep.subr.mxu0 0.0
    %481 = vmatpush2.msra.mxu0 0.0
    %482 = vmatprep.subr.mxu0 0.0
    %483 = vmatpush2.msra.mxu0 0.0
    %484 = vmatprep.subr.mxu0 0.0
    %485 = vmatpush2.msra.mxu0 0.0
    %486 = vmatprep.subr.mxu0 0.0
    %487 = vmatpush2.msra.mxu0 0.0
    %488 = vmatprep.subr.mxu0 0.0
    %489 = vmatpush2.msra.mxu0 0.0
    %490 = vmatprep.subr.mxu0 0.0
    %491 = vmatpush2.msra.mxu0 0.0
    %492 = vmatprep.subr.mxu0 0.0
    %493 = vmatpush2.msra.mxu0 0.0
    %494 = vmatprep.subr.mxu0 0.0
    %495 = vmatpush2.msra.mxu0 0.0
    %496 = vmatprep.subr.mxu0 0.0
    %497 = vmatpush2.msra.mxu0 0.0
    %498 = vmatprep.mubr.f32.mxu0 0.0
    %499 = vmatmul.mubr.f32.gmra.mxu0 %v432
    %v500 = vpop.f32.mrf.mxu0
    %v501 = vadd.f32 0.0, %v500
    %v502 = vpop.f32.mrf.mxu0
    %503 = vdwg.mxu0
    %505 = vrot.lane.b32.xlu0 %v501, 50
    %v506 = vpop.permute.xlu0 %505
    %v508 = vadd.f32 %v126, %v506
    %v509 = vmax.f32 %v508, 0.0
    %v510 = vld [vmem:[%s8] sm:$0x3]
    %v511 = vld [vmem:[%s6] sm:$0xff]
    %v512 = vld [vmem:[%s6 + $0x8] sm:$0xff]
    %v513 = vld [vmem:[%s6 + $0x10] sm:$0xff]
    %v514 = vld [vmem:[%s6 + $0x18] sm:$0xff]
    %v515 = vlaneseq
    %v516 = vshrl.u32 %v515, 7
    %v517 = vsub.s32 0, %v516
    %v518 = vrot.slane %v510, %v517
    %520 = vrot.lane.b32.xlu0 %v509, 78
    %v521 = vpop.permute.xlu0 %520
    %v522 = vsel %vm137, %v521, 0
    %524 = vmatprep.subr.mxu0 0.0
    %525 = vmatpush1.msra.mxu0 0.0
    %526 = vmatprep.subr.mxu0 0.0
    %527 = vmatpush1.msra.mxu0 0.0
    %528 = vmatprep.subr.mxu0 0.0
    %529 = vmatpush1.msra.mxu0 0.0
    %530 = vmatprep.subr.mxu0 0.0
    %531 = vmatpush1.msra.mxu0 0.0
    %532 = vmatprep.subr.mxu0 0.0
    %533 = vmatpush1.msra.mxu0 0.0
    %534 = vmatprep.subr.mxu0 0.0
    %535 = vmatpush1.msra.mxu0 0.0
    %536 = vmatprep.subr.mxu0 0.0
    %537 = vmatpush1.msra.mxu0 0.0
    %538 = vmatprep.subr.mxu0 0.0
    %539 = vmatpush1.msra.mxu0 0.0
    %540 = vmatprep.subr.mxu0 0.0
    %541 = vmatpush1.msra.mxu0 0.0
    %542 = vmatprep.subr.mxu0 0.0
    %543 = vmatpush1.msra.mxu0 0.0
    %544 = vmatprep.subr.mxu0 0.0
    %545 = vmatpush1.msra.mxu0 0.0
    %546 = vmatprep.subr.mxu0 0.0
    %547 = vmatpush1.msra.mxu0 0.0
    %548 = vmatprep.subr.mxu0 0.0
    %549 = vmatpush1.msra.mxu0 %v514
    %550 = vmatprep.subr.mxu0 0.0
    %551 = vmatpush1.msra.mxu0 %v513
    %552 = vmatprep.subr.mxu0 0.0
    %553 = vmatpush1.msra.mxu0 %v512
    %554 = vmatprep.subr.mxu0 0.0
    %555 = vmatpush1.msra.mxu0 %v511
    %556 = vmatprep.subr.mxu0 0.0
    %557 = vmatpush2.msra.mxu0 0.0
    %558 = vmatprep.subr.mxu0 0.0
    %559 = vmatpush2.msra.mxu0 0.0
    %560 = vmatprep.subr.mxu0 0.0
    %561 = vmatpush2.msra.mxu0 0.0
    %562 = vmatprep.subr.mxu0 0.0
    %563 = vmatpush2.msra.mxu0 0.0
    %564 = vmatprep.subr.mxu0 0.0
    %565 = vmatpush2.msra.mxu0 0.0
    %566 = vmatprep.subr.mxu0 0.0
    %567 = vmatpush2.msra.mxu0 0.0
    %568 = vmatprep.subr.mxu0 0.0
    %569 = vmatpush2.msra.mxu0 0.0
    %570 = vmatprep.subr.mxu0 0.0
    %571 = vmatpush2.msra.mxu0 0.0
    %572 = vmatprep.subr.mxu0 0.0
    %573 = vmatpush2.msra.mxu0 0.0
    %574 = vmatprep.subr.mxu0 0.0
    %575 = vmatpush2.msra.mxu0 0.0
    %576 = vmatprep.subr.mxu0 0.0
    %577 = vmatpush2.msra.mxu0 0.0
    %578 = vmatprep.subr.mxu0 0.0
    %579 = vmatpush2.msra.mxu0 0.0
    %580 = vmatprep.subr.mxu0 0.0
    %581 = vmatpush2.msra.mxu0 0.0
    %582 = vmatprep.subr.mxu0 0.0
    %583 = vmatpush2.msra.mxu0 0.0
    %584 = vmatprep.subr.mxu0 0.0
    %585 = vmatpush2.msra.mxu0 0.0
    %586 = vmatprep.subr.mxu0 0.0
    %587 = vmatpush2.msra.mxu0 0.0
    %588 = vmatprep.mubr.f32.mxu0 0.0
    %589 = vmatmul.mubr.f32.gmra.mxu0 %v522
    %v590 = vpop.f32.mrf.mxu0
    %v591 = vadd.f32 %v518, %v590
    %v592 = vpop.f32.mrf.mxu0
    %593 = vdwg.mxu0
    %v594 = vlaneseq
    %v595 = vshrl.u32 %v594, 7
    %v596 = vsub.s32 1, %v595
    %v597 = vrot.slane %v510, %v596
    %599 = vrot.lane.b32.xlu0 %v597, 50
    %v600 = vpop.permute.xlu0 %599
    %v602 = vadd.f32 %v208, %v600
    %v603 = vadd.f32 %v210, %v600
    %605 = vrot.lane.b32.xlu0 %v602, 78
    %v606 = vpop.permute.xlu0 %605
    %v608 = vadd.f32 %v591, %v606
    %v609 = vxor.u32 %v608, 2147483648
    %v610 = vmul.f32 %v609, 1.442695
    %v611 = vpow.pop %v610
    %v612 = vadd.f32 %v611, 1.0
    %v613 = vrcp.pop %v612
    %v614 = vmul.f32 1.0, %v613
    %616 = vrot.lane.b32.xlu0 %v602, 14
    %v617 = vpop.permute.xlu0 %616
    %618 = vrot.lane.b32.xlu0 %v603, 14
    %v619 = vpop.permute.xlu0 %618
    %vm620 = vcmask 113664
    %v621 = vsel %vm620, %v617, %v619
    %v623 = vmul.f32 %v614, %v621
    %625 = vrot.lane.b32.xlu0 %v623, 64
    %v626 = vpop.permute.xlu0 %625
    %v628 = vadd.f32 %v591, %v626
    %v629 = vtanh.pop %v628
    %v630 = vsub.f32 1.0, %v614
    %632 = vrot.lane.b32.xlu0 %v629, 96
    %v633 = vpop.permute.xlu0 %632
    %v635 = vmul.f32 %v630, %v633
    %636 = vrot.lane.b32.xlu0 %v40, 32
    %v637 = vpop.permute.xlu0 %636
    %v639 = vmul.f32 %v614, %v637
    %v640 = vadd.f32 %v635, %v639
    %642 = vrot.lane.b32.xlu0 %v640, 96
    %v643 = vpop.permute.xlu0 %642
    %vm645 = vcmask 254976
    %646 = vst.msk [vmem:[%s11] sm:$0x3] %vm645, %v643
    %v647 = vld [vmem:[%s7] sm:$0xff]
    %v648 = vld [vmem:[%s7 + $0x8] sm:$0xff]
    %v649 = vld [vmem:[%s7 + $0x10] sm:$0xff]
    %v650 = vld [vmem:[%s7 + $0x18] sm:$0xff]
    %v651 = vld [vmem:[%s9] sm:$0x1]
    %v653 = vlaneseq
    %v654 = vshrl.u32 %v653, 7
    %v655 = vsub.s32 0, %v654
    %v656 = vrot.slane %v651, %v655
    %v658 = vsel %vm137, %v643, 0
    %660 = vmatprep.subr.mxu0 0.0
    %661 = vmatpush1.msra.mxu0 0.0
    %662 = vmatprep.subr.mxu0 0.0
    %663 = vmatpush1.msra.mxu0 0.0
    %664 = vmatprep.subr.mxu0 0.0
    %665 = vmatpush1.msra.mxu0 0.0
    %666 = vmatprep.subr.mxu0 0.0
    %667 = vmatpush1.msra.mxu0 0.0
    %668 = vmatprep.subr.mxu0 0.0
    %669 = vmatpush1.msra.mxu0 0.0
    %670 = vmatprep.subr.mxu0 0.0
    %671 = vmatpush1.msra.mxu0 0.0
    %672 = vmatprep.subr.mxu0 0.0
    %673 = vmatpush1.msra.mxu0 0.0
    %674 = vmatprep.subr.mxu0 0.0
    %675 = vmatpush1.msra.mxu0 0.0
    %676 = vmatprep.subr.mxu0 0.0
    %677 = vmatpush1.msra.mxu0 0.0
    %678 = vmatprep.subr.mxu0 0.0
    %679 = vmatpush1.msra.mxu0 0.0
    %680 = vmatprep.subr.mxu0 0.0
    %681 = vmatpush1.msra.mxu0 0.0
    %682 = vmatprep.subr.mxu0 0.0
    %683 = vmatpush1.msra.mxu0 0.0
    %684 = vmatprep.subr.mxu0 0.0
    %685 = vmatpush1.msra.mxu0 %v650
    %686 = vmatprep.subr.mxu0 0.0
    %687 = vmatpush1.msra.mxu0 %v649
    %688 = vmatprep.subr.mxu0 0.0
    %689 = vmatpush1.msra.mxu0 %v648
    %690 = vmatprep.subr.mxu0 0.0
    %691 = vmatpush1.msra.mxu0 %v647
    %692 = vmatprep.subr.mxu0 0.0
    %693 = vmatpush2.msra.mxu0 0.0
    %694 = vmatprep.subr.mxu0 0.0
    %695 = vmatpush2.msra.mxu0 0.0
    %696 = vmatprep.subr.mxu0 0.0
    %697 = vmatpush2.msra.mxu0 0.0
    %698 = vmatprep.subr.mxu0 0.0
    %699 = vmatpush2.msra.mxu0 0.0
    %700 = vmatprep.subr.mxu0 0.0
    %701 = vmatpush2.msra.mxu0 0.0
    %702 = vmatprep.subr.mxu0 0.0
    %703 = vmatpush2.msra.mxu0 0.0
    %704 = vmatprep.subr.mxu0 0.0
    %705 = vmatpush2.msra.mxu0 0.0
    %706 = vmatprep.subr.mxu0 0.0
    %707 = vmatpush2.msra.mxu0 0.0
    %708 = vmatprep.subr.mxu0 0.0
    %709 = vmatpush2.msra.mxu0 0.0
    %710 = vmatprep.subr.mxu0 0.0
    %711 = vmatpush2.msra.mxu0 0.0
    %712 = vmatprep.subr.mxu0 0.0
    %713 = vmatpush2.msra.mxu0 0.0
    %714 = vmatprep.subr.mxu0 0.0
    %715 = vmatpush2.msra.mxu0 0.0
    %716 = vmatprep.subr.mxu0 0.0
    %717 = vmatpush2.msra.mxu0 0.0
    %718 = vmatprep.subr.mxu0 0.0
    %719 = vmatpush2.msra.mxu0 0.0
    %720 = vmatprep.subr.mxu0 0.0
    %721 = vmatpush2.msra.mxu0 0.0
    %722 = vmatprep.subr.mxu0 0.0
    %723 = vmatpush2.msra.mxu0 0.0
    %724 = vmatprep.mubr.f32.mxu0 0.0
    %725 = vmatmul.mubr.f32.gmra.mxu0 %v658
    %v726 = vpop.f32.mrf.mxu0
    %v727 = vadd.f32 %v656, %v726
    %v728 = vpop.f32.mrf.mxu0
    %729 = vdwg.mxu0
    %vm730 = vcmask 320512
    %v731 = vsel %vm730, %v727, -inf
    %732 = vmax.xlane.f32.xlu0 %v731
    %v733 = vpop.xlane.xlu0 %732
    %v734 = vsub.f32 %v727, %v733
    %v735 = vmul.f32 %v734, 1.442695
    %v736 = vpow.pop %v735
    %v737 = vsel %vm730, %v736, 0.0
    %738 = vadd.xlane.f32.xlu0 %v737
    %v739 = vpop.xlane.xlu0 %738
    %v740 = vlog2.pop %v739
    %v741 = vmul.f32 %v740, 0.6931472
    %v742 = vsub.f32 %v734, %v741
    %743 = vst.msk [vmem:[#allocation2] sm:$0x3] %vm730, %v742
    // Predicated region
    $region42: #{attn_decoder_forward.1} parent=1 // pred_check
      _
    $region43: #{attn_decoder_forward.1} parent=1 // pred_check_branch
      %745 = sbr.rel (0) target = $region45
    $region44: #{attn_decoder_forward.1} parent=1 // pred_region
      %s747 = ssub.s32 32, 32
      %748 = vsyncadd [#allocation3], %s747
      %s750 = sshll.u32 [#allocation2], 4
      %s751 = int_to_ptr.vmem [resolvable:$true] %s750
      %753 = dma.vmem_to_hbm [thread:$0]  %s751, 32, %s10, [#allocation3]
    $region45: #{attn_decoder_forward.1} parent=1 // pred_fallthru
      _
    // Predicated region
    $region46: #{attn_decoder_forward.1} parent=1 // pred_check
      _
    $region47: #{attn_decoder_forward.1} parent=1 // pred_check_branch
      %755 = sbr.rel (0) target = $region49
    $region48: #{attn_decoder_forward.1} parent=1 // pred_region
      _
    $region49: #{attn_decoder_forward.1} parent=1 // pred_fallthru
      _
    // Predicated region
    $region50: #{attn_decoder_forward.1} parent=1 // pred_check
      _
    $region51: #{attn_decoder_forward.1} parent=1 // pred_check_branch
      %757 = sbr.rel (0) target = $region53
    $region52: #{attn_decoder_forward.1} parent=1 // pred_region
      %s759 = ssub.s32 32, 32
      %760 = vsyncadd [#allocation5], %s759
      %s762 = sshll.u32 [#allocation4], 4
      %s763 = int_to_ptr.vmem [resolvable:$true] %s762
      %765 = dma.vmem_to_hbm [thread:$0]  %s763, 32, %s12, [#allocation5]
    $region53: #{attn_decoder_forward.1} parent=1 // pred_fallthru
      _
    // Predicated region
    $region54: #{attn_decoder_forward.1} parent=1 // pred_check
      _
    $region55: #{attn_decoder_forward.1} parent=1 // pred_check_branch
      %767 = sbr.rel (0) target = $region57
    $region56: #{attn_decoder_forward.1} parent=1 // pred_region
      %768 = dma.done [#allocation3], 32
    $region57: #{attn_decoder_forward.1} parent=1 // pred_fallthru
      _
    // Predicated region
    $region58: #{attn_decoder_forward.1} parent=1 // pred_check
      _
    $region59: #{attn_decoder_forward.1} parent=1 // pred_check_branch
      %770 = sbr.rel (0) target = $region61
    $region60: #{attn_decoder_forward.1} parent=1 // pred_region
      _
    $region61: #{attn_decoder_forward.1} parent=1 // pred_fallthru
      _
    // Predicated region
    $region62: #{attn_decoder_forward.1} parent=1 // pred_check
      _
    $region63: #{attn_decoder_forward.1} parent=1 // pred_check_branch
      %772 = sbr.rel (0) target = $region65
    $region64: #{attn_decoder_forward.1} parent=1 // pred_region
      %773 = dma.done [#allocation5], 32
    $region65: #{attn_decoder_forward.1} parent=1 // pred_fallthru
      _
    %774 = vsyncpa [#allocation3], 1
    %775 = vsyncpa [#allocation5], 1

</llo_original>
